<compile_context>
chip_gen: v7x
topology: tpu7x:2x2x1
jax: 0.10.0
libtpu: 0.0.40
codegen_flags: <defaults>
</compile_context>

<pallas_src>
import functools

import jax
import jax.numpy as jnp
from jax import lax
from jax.experimental import pallas as pl
from jax.experimental.pallas import tpu as pltpu

LN_EPS = 1e-5  # torch.nn.LayerNorm default


# ------------------------------ small helpers -------------------------------
def _round_up(a, m):
    return (a + m - 1) // m * m


def _cdiv(a, b):
    return -(-a // b)


def _flatten_rows(shape):
    rows = 1
    for s in shape[:-1]:
        rows *= s
    return rows


def _pad2(a, pad_r, pad_c):
    """Zero-pad a 2-D array on the high side; no-op (no copy) if already aligned."""
    if pad_r == 0 and pad_c == 0:
        return a
    return jnp.pad(a, ((0, pad_r), (0, pad_c)))


def _vmem_capacity_bytes():
    """Physical VMEM of the current chip; conservative fallback (v7x per-TC)."""
    try:
        cap = getattr(pltpu.get_tpu_info(), "vmem_capacity_bytes", None)
        if cap:
            return int(cap)
    except Exception:
        pass
    return 64 << 20


def _initial_row_tile(rows_p8, tm_pref):
    """Even cdiv split of rows: <=8 wasted rows per tile, >=2 tiles when big."""
    tm_cap = max(8, min(_round_up(tm_pref, 8), rows_p8))
    n_tiles = _cdiv(rows_p8, tm_cap)
    if n_tiles == 1 and rows_p8 >= 128:
        n_tiles = 2          # give the 2nd TensorCore (v7x megacore) row work
    return _round_up(_cdiv(rows_p8, n_tiles), 8)


def _tn_candidates(dout_p, tn_pref):
    """Descending list of lane-tile sizes that divide dout_p."""
    cands = [t for t in (512, 384, 256, 128)
             if t <= min(tn_pref, dout_p) and dout_p % t == 0]
    if dout_p <= tn_pref and dout_p not in cands:
        cands.insert(0, dout_p)
    if not cands:
        cands = [128]        # dout_p is always a multiple of 128
    return cands


def _fused_footprint(tm, tn, dim_p, x_item, w_item, out_item, y_item):
    """VMEM bytes: double-buffered blocks + LN scratch + f32 temporaries."""
    dbuf_in = tm * dim_p * x_item + dim_p * tn * w_item + 2 * dim_p * 4 + tn * 4
    dbuf_out = tm * tn * out_item
    scratch = tm * dim_p * y_item
    temps = 3 * tm * dim_p * 4            # f32 x / centered x / affine result
    return 2 * (dbuf_in + dbuf_out) + scratch + temps


def _choose_fused_tiles(rows, dim_p, dout_p, x_item, w_item, out_item, y_item,
                        tm_pref, tn_pref, budget):
    rows_p8 = _round_up(rows, 8)
    tm = _initial_row_tile(rows_p8, tm_pref)
    tn_cands = _tn_candidates(dout_p, tn_pref)
    tn = tn_cands[0]
    # Shrink tn first (keeps row tile / weight-restream count), then tm.
    while _fused_footprint(tm, tn, dim_p, x_item, w_item, out_item, y_item) > budget:
        smaller = [t for t in tn_cands if t < tn]
        if smaller:
            tn = smaller[0]
        elif tm > 8:
            tm = _round_up(max(8, tm // 2), 8)
        else:
            break
    return tm, tn


# ------------------- fused LayerNorm + Linear kernel -------------------------
def _fused_ln_linear_kernel(x_ref, g_ref, b_ref, w_ref, wb_ref, o_ref, y_ref,
                            *, dim, mask_lanes):
    # x_ref : (TM, dim_p)   g_ref/b_ref : (1, dim_p)
    # w_ref : (dim_p, TN)   wb_ref      : (1, TN)
    # o_ref : (TM, TN)      y_ref       : (TM, dim_p) persistent VMEM scratch
    @pl.when(pl.program_id(1) == 0)
    def _():
        # LayerNorm computed once per row tile; reused for every dim_out tile.
        x = x_ref[...].astype(jnp.float32)
        inv_d = jnp.float32(1.0 / dim)
        mean = jnp.sum(x, axis=-1, keepdims=True) * inv_d   # padded lanes are 0
        xc = x - mean
        if mask_lanes:
            lane = lax.broadcasted_iota(jnp.int32, x.shape, 1)
            xc_v = jnp.where(lane < dim, xc, 0.0)
        else:
            xc_v = xc
        # Two-pass variance (no E[x^2]-mean^2 cancellation).
        var = jnp.sum(xc_v * xc_v, axis=-1, keepdims=True) * inv_d
        inv = lax.rsqrt(var + LN_EPS)
        # Padded gamma/beta lanes are 0 -> padded lanes of y are exactly 0.
        y = xc * inv * g_ref[...].astype(jnp.float32) + b_ref[...].astype(jnp.float32)
        y_ref[...] = y.astype(y_ref.dtype)

    acc = jnp.dot(y_ref[...], w_ref[...], preferred_element_type=jnp.float32)
    o_ref[...] = (acc + wb_ref[...].astype(jnp.float32)).astype(o_ref.dtype)


def prenorm_linear_pallas(x, gamma, beta, w, b, *, tm=512, tn=512, out_dtype=None):
    """Fused PreNorm(dim, Linear(dim, dim_out)).forward(x)."""
    orig_shape = x.shape
    dim = orig_shape[-1]
    dout = w.shape[-1]
    rows = _flatten_rows(orig_shape)
    out_dtype = x.dtype if out_dtype is None else jnp.dtype(out_dtype)

    dim_p = _round_up(dim, 128)
    dout_p = _round_up(dout, 128)

    x_item = jnp.dtype(x.dtype).itemsize
    w_item = jnp.dtype(w.dtype).itemsize
    out_item = jnp.dtype(out_dtype).itemsize
    y_item = w_item                       # LN scratch stored in the weight dtype

    budget = int(0.75 * _vmem_capacity_bytes())
    tm_eff, tn_eff = _choose_fused_tiles(rows, dim_p, dout_p,
                                         x_item, w_item, out_item, y_item,
                                         tm, tn, budget)
    rows_p = _round_up(rows, tm_eff)

    # Conditional (often zero-cost) padding to lane/sublane-aligned operands.
    x2 = _pad2(x.reshape(rows, dim), rows_p - rows, dim_p - dim)
    g2 = _pad2(gamma.reshape(1, dim), 0, dim_p - dim)
    b2 = _pad2(beta.reshape(1, dim), 0, dim_p - dim)
    w2 = _pad2(w, dim_p - dim, dout_p - dout)
    wb2 = _pad2(b.reshape(1, dout), 0, dout_p - dout)

    footprint = _fused_footprint(tm_eff, tn_eff, dim_p,
                                 x_item, w_item, out_item, y_item)
    vmem_limit = int(min(max(footprint + (4 << 20), 16 << 20), budget))

    grid = (rows_p // tm_eff, dout_p // tn_eff)
    kernel = functools.partial(_fused_ln_linear_kernel,
                               dim=dim, mask_lanes=(dim_p != dim))

    out = pl.pallas_call(
        kernel,
        out_shape=jax.ShapeDtypeStruct((rows_p, dout_p), out_dtype),
        grid_spec=pltpu.PrefetchScalarGridSpec(
            num_scalar_prefetch=0,
            grid=grid,
            in_specs=[
                pl.BlockSpec((tm_eff, dim_p), lambda i, j: (i, 0)),
                pl.BlockSpec((1, dim_p), lambda i, j: (0, 0)),
                pl.BlockSpec((1, dim_p), lambda i, j: (0, 0)),
                pl.BlockSpec((dim_p, tn_eff), lambda i, j: (0, j)),
                pl.BlockSpec((1, tn_eff), lambda i, j: (0, j)),
            ],
            out_specs=pl.BlockSpec((tm_eff, tn_eff), lambda i, j: (i, j)),
            scratch_shapes=[pltpu.VMEM((tm_eff, dim_p), w.dtype)],
        ),
        compiler_params=pltpu.CompilerParams(
            # j must be "arbitrary": the LN scratch is initialized at j == 0.
            dimension_semantics=("parallel", "arbitrary"),
            vmem_limit_bytes=vmem_limit,
        ),
    )(x2, g2, b2, w2, wb2)

    if rows_p != rows or dout_p != dout:
        out = out[:rows, :dout]
    return out.reshape(orig_shape[:-1] + (dout,))


# ----------------- standalone tiled LayerNorm (generic fn path) --------------
def _layernorm_kernel(x_ref, g_ref, b_ref, o_ref, *, dim, mask_lanes):
    x = x_ref[...].astype(jnp.float32)
    inv_d = jnp.float32(1.0 / dim)
    mean = jnp.sum(x, axis=-1, keepdims=True) * inv_d
    xc = x - mean
    if mask_lanes:
        lane = lax.broadcasted_iota(jnp.int32, x.shape, 1)
        xc_v = jnp.where(lane < dim, xc, 0.0)
    else:
        xc_v = xc
    var = jnp.sum(xc_v * xc_v, axis=-1, keepdims=True) * inv_d
    y = xc * lax.rsqrt(var + LN_EPS) * g_ref[...].astype(jnp.float32) \
        + b_ref[...].astype(jnp.float32)
    o_ref[...] = y.astype(o_ref.dtype)


def layernorm_pallas(x, gamma, beta, *, tm=512):
    """LayerNorm over the last axis of x (any leading shape), row-tiled."""
    orig_shape = x.shape
    dim = orig_shape[-1]
    rows = _flatten_rows(orig_shape)

    dim_p = _round_up(dim, 128)
    x_item = jnp.dtype(x.dtype).itemsize

    budget = int(0.75 * _vmem_capacity_bytes())
    rows_p8 = _round_up(rows, 8)
    tm_eff = _initial_row_tile(rows_p8, tm)
    bytes_per_row = dim_p * (2 * x_item + 2 * x_item + 3 * 4)   # dbuf in/out + temps
    fixed_bytes = 2 * (2 * dim_p * 4)                           # gamma / beta
    while tm_eff > 8 and fixed_bytes + tm_eff * bytes_per_row > budget:
        tm_eff = _round_up(max(8, tm_eff // 2), 8)
    rows_p = _round_up(rows, tm_eff)

    x2 = _pad2(x.reshape(rows, dim), rows_p - rows, dim_p - dim)
    g2 = _pad2(gamma.reshape(1, dim), 0, dim_p - dim)
    b2 = _pad2(beta.reshape(1, dim), 0, dim_p - dim)

    vmem_limit = int(min(max(fixed_bytes + tm_eff * bytes_per_row + (4 << 20),
                             16 << 20), budget))

    out = pl.pallas_call(
        functools.partial(_layernorm_kernel, dim=dim, mask_lanes=(dim_p != dim)),
        out_shape=jax.ShapeDtypeStruct((rows_p, dim_p), x.dtype),
        grid_spec=pltpu.PrefetchScalarGridSpec(
            num_scalar_prefetch=0,
            grid=(rows_p // tm_eff,),
            in_specs=[
                pl.BlockSpec((tm_eff, dim_p), lambda i: (i, 0)),
                pl.BlockSpec((1, dim_p), lambda i: (0, 0)),
                pl.BlockSpec((1, dim_p), lambda i: (0, 0)),
            ],
            out_specs=pl.BlockSpec((tm_eff, dim_p), lambda i: (i, 0)),
        ),
        compiler_params=pltpu.CompilerParams(
            dimension_semantics=("parallel",),
            vmem_limit_bytes=vmem_limit,
        ),
    )(x2, g2, b2)

    if rows_p != rows or dim_p != dim:
        out = out[:rows, :dim]
    return out.reshape(orig_shape)


def pre_norm(x, gamma, beta, fn, **kwargs):
    """Generic PreNorm.forward: x = LayerNorm(x); return fn(x, **kwargs)."""
    return fn(layernorm_pallas(x, gamma, beta), **kwargs)


# --------------------------------- reference ---------------------------------
def _layernorm_ref(x, gamma, beta):
    x32 = x.astype(jnp.float32)
    mean = jnp.mean(x32, axis=-1, keepdims=True)
    var = jnp.mean((x32 - mean) ** 2, axis=-1, keepdims=True)
    y = (x32 - mean) * lax.rsqrt(var + LN_EPS) * gamma + beta
    return y.astype(x.dtype)


if __name__ == "__main__":
    key = jax.random.PRNGKey(0)
    k_x, k_g, k_b, k_w, k_wb, k_x2 = jax.random.split(key, 6)

    # --- Test 1: module-sized shapes, dim not a multiple of 128 (pad + mask) ---
    batch, seq, dim, dim_out = 2, 8, 32, 32
    x = jax.random.normal(k_x, (batch, seq, dim), dtype=jnp.float32)
    gamma = 1.0 + 0.1 * jax.random.normal(k_g, (dim,), dtype=jnp.float32)
    beta = 0.1 * jax.random.normal(k_b, (dim,), dtype=jnp.float32)
    w = jax.random.normal(k_w, (dim, dim_out), dtype=jnp.float32) / jnp.sqrt(dim)
    b = 0.1 * jax.random.normal(k_wb, (dim_out,), dtype=jnp.float32)

    ref = _layernorm_ref(x, gamma, beta) @ w + b

    out = jax.block_until_ready(prenorm_linear_pallas(x, gamma, beta, w, b))
    assert out.shape == (batch, seq, dim_out)
    assert jnp.allclose(out, ref, atol=1e-4, rtol=1e-4), "fused f32 mismatch"

    out_bf16 = jax.block_until_ready(
        prenorm_linear_pallas(x, gamma, beta, w.astype(jnp.bfloat16), b))
    assert jnp.allclose(out_bf16, ref, atol=3e-2, rtol=3e-2), "fused bf16 mismatch"

    # --- Test 2: aligned dims (no-pad fast path), multiple row/col tiles so the
    #     LN-hoist scratch is exercised across the j axis and row-tile resets ---
    d2, do2 = 128, 256
    x_2 = jax.random.normal(k_x2, (batch, seq, d2), dtype=jnp.float32)
    g_2 = 1.0 + 0.1 * jax.random.normal(k_g, (d2,), dtype=jnp.float32)
    bt_2 = 0.1 * jax.random.normal(k_b, (d2,), dtype=jnp.float32)
    w_2 = jax.random.normal(k_w, (d2, do2), dtype=jnp.float32) / jnp.sqrt(d2)
    wb_2 = 0.1 * jax.random.normal(k_wb, (do2,), dtype=jnp.float32)
    ref2 = _layernorm_ref(x_2, g_2, bt_2) @ w_2 + wb_2

    out2 = jax.block_until_ready(
        prenorm_linear_pallas(x_2, g_2, bt_2, w_2, wb_2, tm=8, tn=128))  # grid (2, 2)
    assert out2.shape == (batch, seq, do2)
    assert jnp.allclose(out2, ref2, atol=1e-3, rtol=1e-3), "fused tiled mismatch"

    # --- Test 3: generic PreNorm path (standalone LN kernel + arbitrary fn) ---
    ln_out = jax.block_until_ready(layernorm_pallas(x, gamma, beta))
    assert jnp.allclose(ln_out, _layernorm_ref(x, gamma, beta),
                        atol=1e-4, rtol=1e-4), "layernorm mismatch"
    out_generic = jax.block_until_ready(pre_norm(x, gamma, beta, lambda y: y @ w + b))
    assert jnp.allclose(out_generic, ref, atol=1e-4, rtol=1e-4), "generic mismatch"

    print("KERNEL_OK")
</pallas_src>

<mosaic_0001>
module attributes {stable_mosaic.version = 11 : i64} {
  func.func @_fused_ln_linear_kernel(%arg0: i32, %arg1: i32, %arg2: memref<16x128xf32, #tpu.memory_space<vmem>>, %arg3: memref<1x128xf32, #tpu.memory_space<vmem>>, %arg4: memref<1x128xf32, #tpu.memory_space<vmem>>, %arg5: memref<128x128xf32, #tpu.memory_space<vmem>>, %arg6: memref<1x128xf32, #tpu.memory_space<vmem>>, %arg7: memref<16x128xf32, #tpu.memory_space<vmem>>, %arg8: memref<16x128xf32, #tpu.memory_space<vmem>>) attributes {dimension_semantics = [#tpu.dimension_semantics<parallel>, #tpu.dimension_semantics<arbitrary>], iteration_bounds = array<i64: 1, 1>, scalar_prefetch = 0 : i64, scratch_operands = 1 : i64, tpu.core_type = #tpu.core_type<tc>, window_params = [{transform_indices = @transform_0, window_bounds = array<i64: 16, 128>}, {pipeline_mode = #tpu.pipeline_mode<synchronous>, transform_indices = @transform_1, window_bounds = array<i64: 1, 128>}, {pipeline_mode = #tpu.pipeline_mode<synchronous>, transform_indices = @transform_2, window_bounds = array<i64: 1, 128>}, {transform_indices = @transform_3, window_bounds = array<i64: 128, 128>}, {transform_indices = @transform_4, window_bounds = array<i64: 1, 128>}, {transform_indices = @transform_5, window_bounds = array<i64: 16, 128>}]} {
    %c0_i32 = arith.constant 0 : i32
    %0 = arith.cmpi eq, %arg1, %c0_i32 : i32
    %1 = arith.extui %0 : i1 to i32
    %c0_i32_0 = arith.constant 0 : i32
    %2 = arith.cmpi ne, %1, %c0_i32_0 : i32
    scf.if %2 {
      %c0_8 = arith.constant 0 : index
      %c0_9 = arith.constant 0 : index
      %10 = vector.load %arg2[%c0_8, %c0_9] : memref<16x128xf32, #tpu.memory_space<vmem>>, vector<16x128xf32>
      %cst_10 = arith.constant dense<0.000000e+00> : vector<16xf32>
      %11 = vector.multi_reduction <add>, %10, %cst_10 [1] : vector<16x128xf32> to vector<16xf32>
      %12 = vector.shape_cast %11 : vector<16xf32> to vector<16x1xf32>
      %cst_11 = arith.constant 3.125000e-02 : f32
      %13 = vector.broadcast %cst_11 : f32 to vector<16x1xf32>
      %14 = arith.mulf %12, %13 : vector<16x1xf32>
      %15 = vector.broadcast %14 : vector<16x1xf32> to vector<16x128xf32>
      %16 = arith.subf %10, %15 : vector<16x128xf32>
      %17 = tpu.iota {dimensions = array<i32: 1>} : vector<16x128xi32>
      %c32_i32 = arith.constant 32 : i32
      %18 = vector.broadcast %c32_i32 : i32 to vector<16x128xi32>
      %19 = arith.cmpi slt, %17, %18 : vector<16x128xi32>
      %cst_12 = arith.constant 0.000000e+00 : f32
      %20 = vector.broadcast %cst_12 : f32 to vector<16x128xf32>
      %21 = arith.select %19, %16, %20 : vector<16x128xi1>, vector<16x128xf32>
      %22 = arith.mulf %21, %21 : vector<16x128xf32>
      %cst_13 = arith.constant dense<0.000000e+00> : vector<16xf32>
      %23 = vector.multi_reduction <add>, %22, %cst_13 [1] : vector<16x128xf32> to vector<16xf32>
      %24 = vector.shape_cast %23 : vector<16xf32> to vector<16x1xf32>
      %cst_14 = arith.constant 3.125000e-02 : f32
      %25 = vector.broadcast %cst_14 : f32 to vector<16x1xf32>
      %26 = arith.mulf %24, %25 : vector<16x1xf32>
      %cst_15 = arith.constant 9.99999974E-6 : f32
      %27 = vector.broadcast %cst_15 : f32 to vector<16x1xf32>
      %28 = arith.addf %26, %27 : vector<16x1xf32>
      %29 = math.rsqrt %28 : vector<16x1xf32>
      %30 = vector.broadcast %29 : vector<16x1xf32> to vector<16x128xf32>
      %31 = arith.mulf %16, %30 : vector<16x128xf32>
      %c0_16 = arith.constant 0 : index
      %c0_17 = arith.constant 0 : index
      %32 = vector.load %arg3[%c0_16, %c0_17] : memref<1x128xf32, #tpu.memory_space<vmem>>, vector<1x128xf32>
      %33 = vector.broadcast %32 : vector<1x128xf32> to vector<16x128xf32>
      %34 = arith.mulf %31, %33 : vector<16x128xf32>
      %c0_18 = arith.constant 0 : index
      %c0_19 = arith.constant 0 : index
      %35 = vector.load %arg4[%c0_18, %c0_19] : memref<1x128xf32, #tpu.memory_space<vmem>>, vector<1x128xf32>
      %36 = vector.broadcast %35 : vector<1x128xf32> to vector<16x128xf32>
      %37 = arith.addf %34, %36 : vector<16x128xf32>
      %c0_20 = arith.constant 0 : index
      %c0_21 = arith.constant 0 : index
      %38 = vector.load %arg8[%c0_20, %c0_21] : memref<16x128xf32, #tpu.memory_space<vmem>>, vector<16x128xf32>
      tpu.vector_store %arg8[%c0_20, %c0_21], %37 {strides = array<i32>} : memref<16x128xf32, #tpu.memory_space<vmem>>, vector<16x128xf32>,
    } else {
    }
    %c0 = arith.constant 0 : index
    %c0_1 = arith.constant 0 : index
    %3 = vector.load %arg8[%c0, %c0_1] : memref<16x128xf32, #tpu.memory_space<vmem>>, vector<16x128xf32>
    %c0_2 = arith.constant 0 : index
    %c0_3 = arith.constant 0 : index
    %4 = vector.load %arg5[%c0_2, %c0_3] : memref<128x128xf32, #tpu.memory_space<vmem>>, vector<128x128xf32>
    %cst = arith.constant dense<0.000000e+00> : vector<16x128xf32>
    %5 = tpu.matmul %3, %4, %cst {dimension_numbers = #tpu.dot_dimension_numbers<[1], [0], [0], [1], [0, 0, 1, 1], [], []>} : vector<16x128xf32>, vector<128x128xf32>, vector<16x128xf32> -> vector<16x128xf32>
    %c0_4 = arith.constant 0 : index
    %c0_5 = arith.constant 0 : index
    %6 = vector.load %arg6[%c0_4, %c0_5] : memref<1x128xf32, #tpu.memory_space<vmem>>, vector<1x128xf32>
    %7 = vector.broadcast %6 : vector<1x128xf32> to vector<16x128xf32>
    %8 = arith.addf %5, %7 : vector<16x128xf32>
    %c0_6 = arith.constant 0 : index
    %c0_7 = arith.constant 0 : index
    %9 = vector.load %arg7[%c0_6, %c0_7] : memref<16x128xf32, #tpu.memory_space<vmem>>, vector<16x128xf32>
    tpu.vector_store %arg7[%c0_6, %c0_7], %8 {strides = array<i32>} : memref<16x128xf32, #tpu.memory_space<vmem>>, vector<16x128xf32>,
    return
  }
  func.func @transform_0(%arg0: i32, %arg1: i32) -> (i32, i32) {
    %c0_i32 = arith.constant 0 : i32
    %c0_i32_0 = arith.constant 0 : i32
    return %arg0, %c0_i32 : i32, i32
  }
  func.func @transform_1(%arg0: i32, %arg1: i32) -> (i32, i32) {
    %c0_i32 = arith.constant 0 : i32
    %c0_i32_0 = arith.constant 0 : i32
    %c0_i32_1 = arith.constant 0 : i32
    return %c0_i32, %c0_i32_0 : i32, i32
  }
  func.func @transform_2(%arg0: i32, %arg1: i32) -> (i32, i32) {
    %c0_i32 = arith.constant 0 : i32
    %c0_i32_0 = arith.constant 0 : i32
    %c0_i32_1 = arith.constant 0 : i32
    return %c0_i32, %c0_i32_0 : i32, i32
  }
  func.func @transform_3(%arg0: i32, %arg1: i32) -> (i32, i32) {
    %c0_i32 = arith.constant 0 : i32
    %c0_i32_0 = arith.constant 0 : i32
    return %c0_i32, %arg1 : i32, i32
  }
  func.func @transform_4(%arg0: i32, %arg1: i32) -> (i32, i32) {
    %c0_i32 = arith.constant 0 : i32
    %c0_i32_0 = arith.constant 0 : i32
    return %c0_i32, %arg1 : i32, i32
  }
  func.func @transform_5(%arg0: i32, %arg1: i32) -> (i32, i32) {
    %c0_i32 = arith.constant 0 : i32
    return %arg0, %arg1 : i32, i32
  }
}

</mosaic_0001>

<llo_original>
// kernel: tpu_custom_call.1
$region0: #{tpu_custom_call.1}
  #allocation0 [shape = 'u32[]', space=smem, size = 0x4, offset = 0x4, fixed_abs, tag = 'smem constant byte address 0x4 - core index']
  #allocation1 [shape = 'u32[144,128]{1,0:T(1,128)}', space=vmem, size = 0x12000, scoped, tag = 'internal scratch']
  #allocation2 [shape = 'f32[16,128]{1,0:T(8,128)}', space=vmem, size = 0x2000, scoped, tag = 'scratch operand']
  %s0 = inlined_call_operand.hbm [shape: f32[16,128], index: 0, kind: input, shape index: {}]
  %s1 = inlined_call_operand.vmem [shape: f32[1,128], index: 1, kind: input, shape index: {}]
  %s2 = inlined_call_operand.vmem [shape: f32[1,128], index: 2, kind: input, shape index: {}]
  %s3 = inlined_call_operand.hbm [shape: f32[128,128], index: 3, kind: input, shape index: {}]
  %s4 = inlined_call_operand.vmem [shape: f32[1,128], index: 4, kind: input, shape index: {}]
  %s5 = inlined_call_operand.hbm [shape: f32[16,128], index: 5, kind: output, shape index: {}]
  %s6 = sld [smem:[#allocation0]]
  $region42: #{tpu_custom_call.1} parent=0
    _
  %s8 = ssub.s32 1, %s6
  %s9 = scalar_select 0, %s8, %s6
  $region1: #{tpu_custom_call.1} parent=0
    #allocation3 [shape = 'u8[8192]{0}', space=vmem, size = 0x2000, scoped, tag = 'input window, operand 0, single buffered']
    #allocation4 [shape = 's32[1]{0}', space=sflag, size = 0x4, scoped, tag = 'scoped memory for tpu_custom_call.1']
    #allocation5 [shape = 's32[1]{0}', space=sflag, size = 0x4, scoped, tag = 'scoped memory for tpu_custom_call.1']
    #allocation6 [shape = 'u8[65536]{0}', space=vmem, size = 0x10000, scoped, tag = 'input window, operand 3, single buffered']
    #allocation7 [shape = 's32[1]{0}', space=sflag, size = 0x4, scoped, tag = 'scoped memory for tpu_custom_call.1']
    #allocation8 [shape = 'u8[8192]{0}', space=vmem, size = 0x2000, scoped, tag = 'output window, operand 0, single buffered']
    %10 = vsyncpa [#allocation4], 0
    %11 = vsyncpa [#allocation7], 0
    %12 = vsyncpa [#allocation5], 0
    // Predicated region
    $region2: #{tpu_custom_call.1} parent=1 // pred_check
      _
    $region3: #{tpu_custom_call.1} parent=1 // pred_check_branch
      %14 = sbr.rel (0) target = $region5
    $region4: #{tpu_custom_call.1} parent=1 // pred_region
      %s16 = ssub.s32 256, 256
      %17 = vsyncadd [#allocation4], %s16
      %s18 = sshll.u32 [#allocation3], 4
      %s19 = int_to_ptr.vmem [resolvable:$true] %s18
      %24 = dma.hbm_to_vmem [thread:$0]  %s0, 256, %s19, [#allocation4], 128, 128, 8
    $region5: #{tpu_custom_call.1} parent=1 // pred_fallthru
      _
    // Predicated region
    $region6: #{tpu_custom_call.1} parent=1 // pred_check
      _
    $region7: #{tpu_custom_call.1} parent=1 // pred_check_branch
      %26 = sbr.rel (0) target = $region9
    $region8: #{tpu_custom_call.1} parent=1 // pred_region
      _
    $region9: #{tpu_custom_call.1} parent=1 // pred_fallthru
      _
    // Predicated region
    $region10: #{tpu_custom_call.1} parent=1 // pred_check
      _
    $region11: #{tpu_custom_call.1} parent=1 // pred_check_branch
      %28 = sbr.rel (0) target = $region13
    $region12: #{tpu_custom_call.1} parent=1 // pred_region
      _
    $region13: #{tpu_custom_call.1} parent=1 // pred_fallthru
      _
    // Predicated region
    $region14: #{tpu_custom_call.1} parent=1 // pred_check
      _
    $region15: #{tpu_custom_call.1} parent=1 // pred_check_branch
      %30 = sbr.rel (0) target = $region17
    $region16: #{tpu_custom_call.1} parent=1 // pred_region
      %s32 = ssub.s32 2048, 2048
      %33 = vsyncadd [#allocation7], %s32
      %s34 = sshll.u32 [#allocation6], 4
      %s35 = int_to_ptr.vmem [resolvable:$true] %s34
      %40 = dma.hbm_to_vmem [thread:$0]  %s3, 2048, %s35, [#allocation7], 128, 128, 8
    $region17: #{tpu_custom_call.1} parent=1 // pred_fallthru
      _
    // Predicated region
    $region18: #{tpu_custom_call.1} parent=1 // pred_check
      _
    $region19: #{tpu_custom_call.1} parent=1 // pred_check_branch
      %42 = sbr.rel (0) target = $region21
    $region20: #{tpu_custom_call.1} parent=1 // pred_region
      _
    $region21: #{tpu_custom_call.1} parent=1 // pred_fallthru
      _
    // Predicated region
    $region22: #{tpu_custom_call.1} parent=1 // pred_check
      _
    $region23: #{tpu_custom_call.1} parent=1 // pred_check_branch
      %44 = sbr.rel (0) target = $region25
    $region24: #{tpu_custom_call.1} parent=1 // pred_region
      %45 = dma.done [#allocation4], 256
    $region25: #{tpu_custom_call.1} parent=1 // pred_fallthru
      _
    // Predicated region
    $region26: #{tpu_custom_call.1} parent=1 // pred_check
      _
    $region27: #{tpu_custom_call.1} parent=1 // pred_check_branch
      %47 = sbr.rel (0) target = $region29
    $region28: #{tpu_custom_call.1} parent=1 // pred_region
      %48 = dma.done [#allocation7], 2048
    $region29: #{tpu_custom_call.1} parent=1 // pred_fallthru
      _
    %p49 = scmp.eq.s32.totalorder 0, 0
    // Predicated region
    $region30: #{tpu_custom_call.1} parent=1 // pred_check
      %p50 = pneg %p49
    $region31: #{tpu_custom_call.1} parent=1 // pred_check_branch
      %52 = sbr.rel (%p50) target = $region33
    $region32: #{tpu_custom_call.1} parent=1 // pred_region
      %v53 = vld [vmem:[#allocation3] sm:$0xff]
      %v54 = vld [vmem:[#allocation3 + $0x8] sm:$0xff]
      %55 = vadd.xlane.f32.xlu0 %v53
      %v56 = vpop.xlane.xlu0 %55
      %57 = vadd.xlane.f32.xlu0 %v54
      %v58 = vpop.xlane.xlu0 %57
      %v59 = vmul.f32 %v56, 0.03125
      %v60 = vmul.f32 %v58, 0.03125
      %v61 = vsub.f32 %v53, %v59
      %v62 = vsub.f32 %v54, %v60
      %v63 = vlaneseq
      %v64 = vand.u32 %v63, 127
      %vm65 = vcmp.lt.s32.totalorder %v64, 32
      %v66 = vsel %vm65, %v61, 0.0
      %v67 = vsel %vm65, %v62, 0.0
      %v68 = vmul.f32 %v66, %v66
      %v69 = vmul.f32 %v67, %v67
      %70 = vadd.xlane.f32.xlu0 %v68
      %v71 = vpop.xlane.xlu0 %70
      %72 = vadd.xlane.f32.xlu0 %v69
      %v73 = vpop.xlane.xlu0 %72
      %v74 = vmul.f32 %v71, 0.03125
      %v75 = vmul.f32 %v73, 0.03125
      %v76 = vadd.f32 %v74, 1e-05
      %v77 = vadd.f32 %v75, 1e-05
      %v78 = vrsqrt.pop %v76
      %v79 = vrsqrt.pop %v77
      %v80 = vmul.f32 %v61, %v78
      %v81 = vmul.f32 %v62, %v79
      %v82 = vld [vmem:[%s1] sm:$0x1]
      %v84 = vlaneseq
      %v85 = vshrl.u32 %v84, 7
      %v86 = vsub.s32 0, %v85
      %v87 = vrot.slane %v82, %v86
      %v89 = vmul.f32 %v80, %v87
      %v90 = vmul.f32 %v81, %v87
      %v91 = vld [vmem:[%s2] sm:$0x1]
      %v93 = vlaneseq
      %v94 = vshrl.u32 %v93, 7
      %v95 = vsub.s32 0, %v94
      %v96 = vrot.slane %v91, %v95
      %v98 = vadd.f32 %v89, %v96
      %v99 = vadd.f32 %v90, %v96
      %100 = vst [vmem:[#allocation2] sm:$0xff] %v98
      %101 = vst [vmem:[#allocation2 + $0x8] sm:$0xff] %v99
    $region33: #{tpu_custom_call.1} parent=1 // pred_fallthru
      _
    %v102 = vld [vmem:[#allocation2] sm:$0xff]
    %v103 = vld [vmem:[#allocation2 + $0x8] sm:$0xff]
    %v104 = vld [vmem:[#allocation6] sm:$0xff]
    %v105 = vld [vmem:[#allocation6 + $0x8] sm:$0xff]
    %v106 = vld [vmem:[#allocation6 + $0x10] sm:$0xff]
    %v107 = vld [vmem:[#allocation6 + $0x18] sm:$0xff]
    %v108 = vld [vmem:[#allocation6 + $0x20] sm:$0xff]
    %v109 = vld [vmem:[#allocation6 + $0x28] sm:$0xff]
    %v110 = vld [vmem:[#allocation6 + $0x30] sm:$0xff]
    %v111 = vld [vmem:[#allocation6 + $0x38] sm:$0xff]
    %v112 = vld [vmem:[#allocation6 + $0x40] sm:$0xff]
    %v113 = vld [vmem:[#allocation6 + $0x48] sm:$0xff]
    %v114 = vld [vmem:[#allocation6 + $0x50] sm:$0xff]
    %v115 = vld [vmem:[#allocation6 + $0x58] sm:$0xff]
    %v116 = vld [vmem:[#allocation6 + $0x60] sm:$0xff]
    %v117 = vld [vmem:[#allocation6 + $0x68] sm:$0xff]
    %v118 = vld [vmem:[#allocation6 + $0x70] sm:$0xff]
    %v119 = vld [vmem:[#allocation6 + $0x78] sm:$0xff]
    %v120 = vld [vmem:[%s4] sm:$0x1]
    %v122 = vlaneseq
    %v123 = vshrl.u32 %v122, 7
    %v124 = vsub.s32 0, %v123
    %v125 = vrot.slane %v120, %v124
    %127 = vmatprep.subr.mxu0 0.0
    %128 = vmatpush1.msra.mxu0 %v104
    %129 = vmatprep.subr.mxu0 0.0
    %130 = vmatpush1.msra.mxu0 %v105
    %131 = vmatprep.subr.mxu0 0.0
    %132 = vmatpush1.msra.mxu0 %v106
    %133 = vmatprep.subr.mxu0 0.0
    %134 = vmatpush1.msra.mxu0 %v107
    %135 = vmatprep.subr.mxu0 0.0
    %136 = vmatpush1.msra.mxu0 %v108
    %137 = vmatprep.subr.mxu0 0.0
    %138 = vmatpush1.msra.mxu0 %v109
    %139 = vmatprep.subr.mxu0 0.0
    %140 = vmatpush1.msra.mxu0 %v110
    %141 = vmatprep.subr.mxu0 0.0
    %142 = vmatpush1.msra.mxu0 %v111
    %143 = vmatprep.subr.mxu0 0.0
    %144 = vmatpush1.msra.mxu0 %v112
    %145 = vmatprep.subr.mxu0 0.0
    %146 = vmatpush1.msra.mxu0 %v113
    %147 = vmatprep.subr.mxu0 0.0
    %148 = vmatpush1.msra.mxu0 %v114
    %149 = vmatprep.subr.mxu0 0.0
    %150 = vmatpush1.msra.mxu0 %v115
    %151 = vmatprep.subr.mxu0 0.0
    %152 = vmatpush1.msra.mxu0 %v116
    %153 = vmatprep.subr.mxu0 0.0
    %154 = vmatpush1.msra.mxu0 %v117
    %155 = vmatprep.subr.mxu0 0.0
    %156 = vmatpush1.msra.mxu0 %v118
    %157 = vmatprep.subr.mxu0 0.0
    %158 = vmatpush1.msra.mxu0 %v119
    %159 = vmatprep.subr.mxu0 0.0
    %160 = vmatpush1.msra.mxu0 0.0
    %161 = vmatprep.subr.mxu0 0.0
    %162 = vmatpush1.msra.mxu0 0.0
    %163 = vmatprep.subr.mxu0 0.0
    %164 = vmatpush1.msra.mxu0 0.0
    %165 = vmatprep.subr.mxu0 0.0
    %166 = vmatpush1.msra.mxu0 0.0
    %167 = vmatprep.subr.mxu0 0.0
    %168 = vmatpush1.msra.mxu0 0.0
    %169 = vmatprep.subr.mxu0 0.0
    %170 = vmatpush1.msra.mxu0 0.0
    %171 = vmatprep.subr.mxu0 0.0
    %172 = vmatpush1.msra.mxu0 0.0
    %173 = vmatprep.subr.mxu0 0.0
    %174 = vmatpush1.msra.mxu0 0.0
    %175 = vmatprep.subr.mxu0 0.0
    %176 = vmatpush1.msra.mxu0 0.0
    %177 = vmatprep.subr.mxu0 0.0
    %178 = vmatpush1.msra.mxu0 0.0
    %179 = vmatprep.subr.mxu0 0.0
    %180 = vmatpush1.msra.mxu0 0.0
    %181 = vmatprep.subr.mxu0 0.0
    %182 = vmatpush1.msra.mxu0 0.0
    %183 = vmatprep.subr.mxu0 0.0
    %184 = vmatpush1.msra.mxu0 0.0
    %185 = vmatprep.subr.mxu0 0.0
    %186 = vmatpush1.msra.mxu0 0.0
    %187 = vmatprep.subr.mxu0 0.0
    %188 = vmatpush1.msra.mxu0 0.0
    %189 = vmatprep.subr.mxu0 0.0
    %190 = vmatpush1.msra.mxu0 0.0
    %191 = vmatprep.mubr.f32.mxu0 0.0
    %192 = vmatmul.mubr.f32.gmra.mrb[0].mxu0 %v102
    %v193 = vpop.f32.mrb[0].mxu0
    %v194 = vadd.f32 %v125, %v193
    %v195 = vpop.f32.mrb[0].mxu0
    %196 = vmatprep.mubr.f32.mxu0 0.0
    %197 = vmatmul.mubr.f32.gmra.mrb[0].mxu0 %v103
    %v198 = vpop.f32.mrb[0].mxu0
    %v199 = vadd.f32 %v125, %v198
    %v200 = vpop.f32.mrb[0].mxu0
    %201 = vdwg.mxu0
    %202 = vst [vmem:[#allocation8] sm:$0xff] %v194
    %203 = vst [vmem:[#allocation8 + $0x8] sm:$0xff] %v199
    // Predicated region
    $region34: #{tpu_custom_call.1} parent=1 // pred_check
      _
    $region35: #{tpu_custom_call.1} parent=1 // pred_check_branch
      %205 = sbr.rel (0) target = $region37
    $region36: #{tpu_custom_call.1} parent=1 // pred_region
      %s207 = ssub.s32 256, 256
      %208 = vsyncadd [#allocation5], %s207
      %s209 = sshll.u32 [#allocation8], 4
      %s210 = int_to_ptr.vmem [resolvable:$true] %s209
      %215 = dma.vmem_to_hbm [thread:$0]  %s210, 256, %s5, [#allocation5], 128, 128, 8
    $region37: #{tpu_custom_call.1} parent=1 // pred_fallthru
      _
    // Predicated region
    $region38: #{tpu_custom_call.1} parent=1 // pred_check
      _
    $region39: #{tpu_custom_call.1} parent=1 // pred_check_branch
      %217 = sbr.rel (0) target = $region41
    $region40: #{tpu_custom_call.1} parent=1 // pred_region
      %218 = dma.done [#allocation5], 256
    $region41: #{tpu_custom_call.1} parent=1 // pred_fallthru
      _
    %219 = vsyncpa [#allocation4], 1
    %220 = vsyncpa [#allocation7], 1
    %221 = vsyncpa [#allocation5], 1

</llo_original>
